<compile_context>
chip_gen: v7x
topology: tpu7x:2x2x1
jax: 0.10.0
libtpu: 0.0.40
codegen_flags: <defaults>
</compile_context>

<pallas_src>
import functools

import jax
import jax.numpy as jnp
from jax.experimental import pallas as pl
from jax.experimental.pallas import tpu as pltpu

HIDDEN = 256


def qnet_kernel(x_ref, w1_ref, b1_ref, w2_ref, b2_ref, w3_ref, b3_ref, o_ref):
    # Layer 1: (tb, in_dim) @ (in_dim, 256) + bias -> ReLU.  f32 accumulation.
    h1 = jnp.dot(x_ref[...].astype(w1_ref.dtype), w1_ref[...],
                 preferred_element_type=jnp.float32)
    h1 = jnp.maximum(h1 + b1_ref[...], 0.0)

    # Layer 2: (tb, 256) @ (256, 256) + bias -> ReLU.
    h2 = jnp.dot(h1.astype(w2_ref.dtype), w2_ref[...],
                 preferred_element_type=jnp.float32)
    h2 = jnp.maximum(h2 + b2_ref[...], 0.0)

    # Output layer (256 -> 1): VPU multiply + cross-lane (XLU) reduce instead
    # of a 128-column-padded MXU pass.  Removes the 127/128 wasted layer-3
    # MXU flops and writes 4 bytes per row to HBM instead of 512.
    w3_row = w3_ref[...].astype(jnp.float32)                 # (1, 256)
    q = jnp.sum(h2 * w3_row, axis=-1, keepdims=True)         # (tb, 1)
    o_ref[...] = (q + b3_ref[...]).astype(o_ref.dtype)


def _round_up(n, m):
    return (n + m - 1) // m * m


@functools.partial(jax.jit, static_argnames=("block_b",))
def qnetwork_forward(state, action, params, *, block_b=512):
    """state: (B, state_dim), action: (B, ac_dim) -> (B, 1) float32 Q-values."""
    B, state_dim = state.shape
    ac_dim = action.shape[1]
    in_dim = state_dim + ac_dim

    w1, b1 = params["w1"], params["b1"]
    w2, b2 = params["w2"], params["b2"]
    w3, b3 = params["w3"], params["b3"]

    # torch.cat([state, action], dim=1), done once in the wrapper so the
    # kernel runs one layer-1 matmul instead of two tiny ones.  If weights
    # are low precision (bf16), cast inputs too -> halves the input DMA.
    x = jnp.concatenate([state, action], axis=1).astype(w1.dtype)

    # Last-layer weights as a (1, 256) row for the in-kernel VPU reduce.
    w3t = w3.T                                   # (1, HIDDEN)

    # Adaptive batch tiling: pick the tile count first, then the smallest
    # multiple-of-8 tile that covers B, minimizing padded rows while keeping
    # tiles large (amortizes per-grid-step overhead).  Small B -> one step.
    # NOTE: on v7x, lowering block_b (so n_tiles >= 2) lets both TensorCores
    # split the batch via the "parallel" grid axis.
    b8 = _round_up(max(B, 1), 8)
    n_tiles = -(-b8 // block_b)                  # ceil-div, >= 1
    tb = _round_up(-(-b8 // n_tiles), 8)
    bp = n_tiles * tb
    if bp != B:
        x = jnp.pad(x, ((0, bp - B), (0, 0)))

    const = lambda i: (0, 0)                     # weights/biases stay resident

    out = pl.pallas_call(
        qnet_kernel,
        out_shape=jax.ShapeDtypeStruct((bp, 1), jnp.float32),
        grid=(n_tiles,),
        in_specs=[
            pl.BlockSpec((tb, in_dim), lambda i: (i, 0)),
            pl.BlockSpec(w1.shape, const),
            pl.BlockSpec(b1.shape, const),
            pl.BlockSpec(w2.shape, const),
            pl.BlockSpec(b2.shape, const),
            pl.BlockSpec(w3t.shape, const),
            pl.BlockSpec(b3.shape, const),
        ],
        out_specs=pl.BlockSpec((tb, 1), lambda i: (i, 0)),
        compiler_params=pltpu.CompilerParams(
            dimension_semantics=("parallel",),
        ),
    )(x, w1, b1, w2, b2, w3t, b3)

    return out[:B]


def init_params(key, state_dim, ac_dim, hidden=HIDDEN, weight_dtype=jnp.float32):
    """Mirrors nn.Linear default init (uniform +/- 1/sqrt(fan_in))."""
    in_dim = state_dim + ac_dim
    ks = jax.random.split(key, 6)

    def lin(kw, kb, fan_in, fan_out):
        bound = 1.0 / jnp.sqrt(fan_in)
        w = jax.random.uniform(kw, (fan_in, fan_out), jnp.float32, -bound, bound)
        b = jax.random.uniform(kb, (1, fan_out), jnp.float32, -bound, bound)
        return w.astype(weight_dtype), b        # biases stay f32

    w1, b1 = lin(ks[0], ks[1], in_dim, hidden)
    w2, b2 = lin(ks[2], ks[3], hidden, hidden)
    w3, b3 = lin(ks[4], ks[5], hidden, 1)
    return dict(w1=w1, b1=b1, w2=w2, b2=b2, w3=w3, b3=b3)


if __name__ == "__main__":
    key = jax.random.PRNGKey(0)
    k_s, k_a, k_p = jax.random.split(key, 3)

    batch, state_dim, ac_dim = 8, 12, 4
    state = jax.random.normal(k_s, (batch, state_dim), jnp.float32)
    action = jax.random.normal(k_a, (batch, ac_dim), jnp.float32)

    # f32 weights: tight check against a plain-JAX reference forward pass.
    params = init_params(k_p, state_dim, ac_dim, weight_dtype=jnp.float32)
    q = qnetwork_forward(state, action, params)
    jax.block_until_ready(q)

    x = jnp.concatenate([state, action], axis=1)
    h1 = jnp.maximum(x @ params["w1"] + params["b1"], 0.0)
    h2 = jnp.maximum(h1 @ params["w2"] + params["b2"], 0.0)
    q_ref = h2 @ params["w3"] + params["b3"]

    assert q.shape == (batch, 1), q.shape
    assert jnp.allclose(q, q_ref, atol=1e-4, rtol=1e-4), "f32 Q mismatch"

    # bf16-weight fast path (v6e/v7x): inputs are cast to bf16 too, MXU
    # accumulates in f32 -> loose tolerance only.
    params_bf16 = jax.tree_util.tree_map(
        lambda a: a.astype(jnp.bfloat16) if a.ndim == 2 and a.shape[0] > 1 else a,
        params)
    q_bf16 = qnetwork_forward(state, action, params_bf16)
    jax.block_until_ready(q_bf16)
    assert jnp.allclose(q_bf16, q_ref, atol=5e-2, rtol=5e-2), "bf16 Q mismatch"

    print("KERNEL_OK")
</pallas_src>

<mosaic_0001>
module attributes {stable_mosaic.version = 11 : i64} {
  func.func @qnet_kernel(%arg0: i32, %arg1: memref<8x16xf32, #tpu.memory_space<vmem>>, %arg2: memref<16x256xf32, #tpu.memory_space<vmem>>, %arg3: memref<1x256xf32, #tpu.memory_space<vmem>>, %arg4: memref<256x256xf32, #tpu.memory_space<vmem>>, %arg5: memref<1x256xf32, #tpu.memory_space<vmem>>, %arg6: memref<1x256xf32, #tpu.memory_space<vmem>>, %arg7: memref<1x1xf32, #tpu.memory_space<vmem>>, %arg8: memref<8x1xf32, #tpu.memory_space<vmem>>) attributes {dimension_semantics = [#tpu.dimension_semantics<parallel>], iteration_bounds = array<i64: 1>, scalar_prefetch = 0 : i64, scratch_operands = 0 : i64, tpu.core_type = #tpu.core_type<tc>, window_params = [{transform_indices = @transform_0, window_bounds = array<i64: 8, 16>}, {pipeline_mode = #tpu.pipeline_mode<synchronous>, transform_indices = @transform_1, window_bounds = array<i64: 16, 256>}, {pipeline_mode = #tpu.pipeline_mode<synchronous>, transform_indices = @transform_2, window_bounds = array<i64: 1, 256>}, {pipeline_mode = #tpu.pipeline_mode<synchronous>, transform_indices = @transform_3, window_bounds = array<i64: 256, 256>}, {pipeline_mode = #tpu.pipeline_mode<synchronous>, transform_indices = @transform_4, window_bounds = array<i64: 1, 256>}, {pipeline_mode = #tpu.pipeline_mode<synchronous>, transform_indices = @transform_5, window_bounds = array<i64: 1, 256>}, {pipeline_mode = #tpu.pipeline_mode<synchronous>, transform_indices = @transform_6, window_bounds = array<i64: 1, 1>}, {transform_indices = @transform_7, window_bounds = array<i64: 8, 1>}]} {
    %c0 = arith.constant 0 : index
    %c0_0 = arith.constant 0 : index
    %0 = vector.load %arg1[%c0, %c0_0] : memref<8x16xf32, #tpu.memory_space<vmem>>, vector<8x16xf32>
    %c0_1 = arith.constant 0 : index
    %c0_2 = arith.constant 0 : index
    %1 = vector.load %arg2[%c0_1, %c0_2] : memref<16x256xf32, #tpu.memory_space<vmem>>, vector<16x256xf32>
    %cst = arith.constant dense<0.000000e+00> : vector<8x256xf32>
    %2 = tpu.matmul %0, %1, %cst {dimension_numbers = #tpu.dot_dimension_numbers<[1], [0], [0], [1], [0, 0, 1, 1], [], []>} : vector<8x16xf32>, vector<16x256xf32>, vector<8x256xf32> -> vector<8x256xf32>
    %c0_3 = arith.constant 0 : index
    %c0_4 = arith.constant 0 : index
    %3 = vector.load %arg3[%c0_3, %c0_4] : memref<1x256xf32, #tpu.memory_space<vmem>>, vector<1x256xf32>
    %4 = vector.broadcast %3 : vector<1x256xf32> to vector<8x256xf32>
    %5 = arith.addf %2, %4 : vector<8x256xf32>
    %cst_5 = arith.constant 0.000000e+00 : f32
    %6 = vector.broadcast %cst_5 : f32 to vector<8x256xf32>
    %7 = arith.maximumf %5, %6 : vector<8x256xf32>
    %c0_6 = arith.constant 0 : index
    %c0_7 = arith.constant 0 : index
    %8 = vector.load %arg4[%c0_6, %c0_7] : memref<256x256xf32, #tpu.memory_space<vmem>>, vector<256x256xf32>
    %cst_8 = arith.constant dense<0.000000e+00> : vector<8x256xf32>
    %9 = tpu.matmul %7, %8, %cst_8 {dimension_numbers = #tpu.dot_dimension_numbers<[1], [0], [0], [1], [0, 0, 1, 1], [], []>} : vector<8x256xf32>, vector<256x256xf32>, vector<8x256xf32> -> vector<8x256xf32>
    %c0_9 = arith.constant 0 : index
    %c0_10 = arith.constant 0 : index
    %10 = vector.load %arg5[%c0_9, %c0_10] : memref<1x256xf32, #tpu.memory_space<vmem>>, vector<1x256xf32>
    %11 = vector.broadcast %10 : vector<1x256xf32> to vector<8x256xf32>
    %12 = arith.addf %9, %11 : vector<8x256xf32>
    %cst_11 = arith.constant 0.000000e+00 : f32
    %13 = vector.broadcast %cst_11 : f32 to vector<8x256xf32>
    %14 = arith.maximumf %12, %13 : vector<8x256xf32>
    %c0_12 = arith.constant 0 : index
    %c0_13 = arith.constant 0 : index
    %15 = vector.load %arg6[%c0_12, %c0_13] : memref<1x256xf32, #tpu.memory_space<vmem>>, vector<1x256xf32>
    %16 = vector.broadcast %15 : vector<1x256xf32> to vector<8x256xf32>
    %17 = arith.mulf %14, %16 : vector<8x256xf32>
    %cst_14 = arith.constant dense<0.000000e+00> : vector<8xf32>
    %18 = vector.multi_reduction <add>, %17, %cst_14 [1] : vector<8x256xf32> to vector<8xf32>
    %19 = vector.shape_cast %18 : vector<8xf32> to vector<8x1xf32>
    %c0_15 = arith.constant 0 : index
    %c0_16 = arith.constant 0 : index
    %20 = vector.load %arg7[%c0_15, %c0_16] : memref<1x1xf32, #tpu.memory_space<vmem>>, vector<1x1xf32>
    %21 = vector.broadcast %20 : vector<1x1xf32> to vector<8x1xf32>
    %22 = arith.addf %19, %21 : vector<8x1xf32>
    %c0_17 = arith.constant 0 : index
    %c0_18 = arith.constant 0 : index
    %23 = vector.load %arg8[%c0_17, %c0_18] : memref<8x1xf32, #tpu.memory_space<vmem>>, vector<8x1xf32>
    tpu.vector_store %arg8[%c0_17, %c0_18], %22 {strides = array<i32>} : memref<8x1xf32, #tpu.memory_space<vmem>>, vector<8x1xf32>,
    return
  }
  func.func @transform_0(%arg0: i32) -> (i32, i32) {
    %c0_i32 = arith.constant 0 : i32
    %c0_i32_0 = arith.constant 0 : i32
    return %arg0, %c0_i32 : i32, i32
  }
  func.func @transform_1(%arg0: i32) -> (i32, i32) {
    %c0_i32 = arith.constant 0 : i32
    %c0_i32_0 = arith.constant 0 : i32
    %c0_i32_1 = arith.constant 0 : i32
    return %c0_i32, %c0_i32_0 : i32, i32
  }
  func.func @transform_2(%arg0: i32) -> (i32, i32) {
    %c0_i32 = arith.constant 0 : i32
    %c0_i32_0 = arith.constant 0 : i32
    %c0_i32_1 = arith.constant 0 : i32
    return %c0_i32, %c0_i32_0 : i32, i32
  }
  func.func @transform_3(%arg0: i32) -> (i32, i32) {
    %c0_i32 = arith.constant 0 : i32
    %c0_i32_0 = arith.constant 0 : i32
    %c0_i32_1 = arith.constant 0 : i32
    return %c0_i32, %c0_i32_0 : i32, i32
  }
  func.func @transform_4(%arg0: i32) -> (i32, i32) {
    %c0_i32 = arith.constant 0 : i32
    %c0_i32_0 = arith.constant 0 : i32
    %c0_i32_1 = arith.constant 0 : i32
    return %c0_i32, %c0_i32_0 : i32, i32
  }
  func.func @transform_5(%arg0: i32) -> (i32, i32) {
    %c0_i32 = arith.constant 0 : i32
    %c0_i32_0 = arith.constant 0 : i32
    %c0_i32_1 = arith.constant 0 : i32
    return %c0_i32, %c0_i32_0 : i32, i32
  }
  func.func @transform_6(%arg0: i32) -> (i32, i32) {
    %c0_i32 = arith.constant 0 : i32
    %c0_i32_0 = arith.constant 0 : i32
    %c0_i32_1 = arith.constant 0 : i32
    return %c0_i32, %c0_i32_0 : i32, i32
  }
  func.func @transform_7(%arg0: i32) -> (i32, i32) {
    %c0_i32 = arith.constant 0 : i32
    %c0_i32_0 = arith.constant 0 : i32
    return %arg0, %c0_i32 : i32, i32
  }
}

</mosaic_0001>

<llo_original>
// kernel: qnetwork_forward.1
$region0: #{qnetwork_forward.1}
  #allocation0 [shape = 'u32[]', space=smem, size = 0x4, offset = 0x4, fixed_abs, tag = 'smem constant byte address 0x4 - core index']
  #allocation1 [shape = 'u32[144,128]{1,0:T(1,128)}', space=vmem, size = 0x12000, scoped, tag = 'internal scratch']
  #allocation2 [shape = 'f32[1,1]{1,0:T(1,128)S(1)}', space=vmem, size = 0x200, scoped, tag = 'scoped memory for qnetwork_forward.1']
  %s0 = inlined_call_operand.vmem [shape: f32[8,16], index: 0, kind: input, shape index: {}]
  %s1 = inlined_call_operand.vmem [shape: f32[16,256], index: 1, kind: input, shape index: {}]
  %s2 = inlined_call_operand.vmem [shape: f32[1,256], index: 2, kind: input, shape index: {}]
  %s3 = inlined_call_operand.hbm [shape: f32[256,256], index: 3, kind: input, shape index: {}]
  %s4 = inlined_call_operand.vmem [shape: f32[1,256], index: 4, kind: input, shape index: {}]
  %s5 = inlined_call_operand.vmem [shape: f32[1,256], index: 5, kind: input, shape index: {}]
  %s6 = inlined_call_operand.<no memory space> [shape: f32[1,1], index: 6, kind: input, shape index: {}]
  %s7 = inlined_call_operand.vmem [shape: f32[8,1], index: 7, kind: output, shape index: {}]
  %s8 = sld [smem:[#allocation0]]
  $region42: #{qnetwork_forward.1} parent=0
    _
  %s10 = ssub.s32 1, %s8
  %s11 = scalar_select 0, %s10, %s8
  %v12 = vstv %s6
  %13 = vst [vmem:[#allocation2] sm:$0x1] %v12
  $region1: #{qnetwork_forward.1} parent=0
    #allocation3 [shape = 'u8[262144]{0}', space=vmem, size = 0x40000, scoped, tag = 'input window, operand 3, single buffered']
    #allocation4 [shape = 's32[1]{0}', space=sflag, size = 0x4, scoped, tag = 'scoped memory for qnetwork_forward.1']
    %14 = vsyncpa [#allocation4], 0
    // Predicated region
    $region2: #{qnetwork_forward.1} parent=1 // pred_check
      _
    $region3: #{qnetwork_forward.1} parent=1 // pred_check_branch
      %16 = sbr.rel (0) target = $region5
    $region4: #{qnetwork_forward.1} parent=1 // pred_region
      _
    $region5: #{qnetwork_forward.1} parent=1 // pred_fallthru
      _
    // Predicated region
    $region6: #{qnetwork_forward.1} parent=1 // pred_check
      _
    $region7: #{qnetwork_forward.1} parent=1 // pred_check_branch
      %18 = sbr.rel (0) target = $region9
    $region8: #{qnetwork_forward.1} parent=1 // pred_region
      _
    $region9: #{qnetwork_forward.1} parent=1 // pred_fallthru
      _
    // Predicated region
    $region10: #{qnetwork_forward.1} parent=1 // pred_check
      _
    $region11: #{qnetwork_forward.1} parent=1 // pred_check_branch
      %20 = sbr.rel (0) target = $region13
    $region12: #{qnetwork_forward.1} parent=1 // pred_region
      _
    $region13: #{qnetwork_forward.1} parent=1 // pred_fallthru
      _
    // Predicated region
    $region14: #{qnetwork_forward.1} parent=1 // pred_check
      _
    $region15: #{qnetwork_forward.1} parent=1 // pred_check_branch
      %22 = sbr.rel (0) target = $region17
    $region16: #{qnetwork_forward.1} parent=1 // pred_region
      %s24 = ssub.s32 8192, 8192
      %25 = vsyncadd [#allocation4], %s24
      %s26 = sshll.u32 [#allocation3], 4
      %s27 = int_to_ptr.vmem [resolvable:$true] %s26
      %32 = dma.hbm_to_vmem [thread:$0]  %s3, 8192, %s27, [#allocation4], 256, 256, 16
    $region17: #{qnetwork_forward.1} parent=1 // pred_fallthru
      _
    // Predicated region
    $region18: #{qnetwork_forward.1} parent=1 // pred_check
      _
    $region19: #{qnetwork_forward.1} parent=1 // pred_check_branch
      %34 = sbr.rel (0) target = $region21
    $region20: #{qnetwork_forward.1} parent=1 // pred_region
      _
    $region21: #{qnetwork_forward.1} parent=1 // pred_fallthru
      _
    // Predicated region
    $region22: #{qnetwork_forward.1} parent=1 // pred_check
      _
    $region23: #{qnetwork_forward.1} parent=1 // pred_check_branch
      %36 = sbr.rel (0) target = $region25
    $region24: #{qnetwork_forward.1} parent=1 // pred_region
      _
    $region25: #{qnetwork_forward.1} parent=1 // pred_fallthru
      _
    // Predicated region
    $region26: #{qnetwork_forward.1} parent=1 // pred_check
      _
    $region27: #{qnetwork_forward.1} parent=1 // pred_check_branch
      %38 = sbr.rel (0) target = $region29
    $region28: #{qnetwork_forward.1} parent=1 // pred_region
      _
    $region29: #{qnetwork_forward.1} parent=1 // pred_fallthru
      _
    // Predicated region
    $region30: #{qnetwork_forward.1} parent=1 // pred_check
      _
    $region31: #{qnetwork_forward.1} parent=1 // pred_check_branch
      %40 = sbr.rel (0) target = $region33
    $region32: #{qnetwork_forward.1} parent=1 // pred_region
      %41 = dma.done [#allocation4], 8192
    $region33: #{qnetwork_forward.1} parent=1 // pred_fallthru
      _
    %v42 = vld [vmem:[%s0] sm:$0xff]
    %v43 = vld [vmem:[%s1] sm:$0xff]
    %v44 = vld [vmem:[%s1 + $0x8] sm:$0xff]
    %v45 = vld [vmem:[%s1 + $0x10] sm:$0xff]
    %v46 = vld [vmem:[%s1 + $0x18] sm:$0xff]
    %v47 = vld [vmem:[%s2] sm:$0x3]
    %v49 = vlaneseq
    %v50 = vshrl.u32 %v49, 7
    %v51 = vsub.s32 0, %v50
    %v52 = vrot.slane %v47, %v51
    %v53 = vlaneseq
    %v54 = vshrl.u32 %v53, 7
    %v55 = vsub.s32 1, %v54
    %v56 = vrot.slane %v47, %v55
    %vm59 = vcmask 130048
    %v61 = vsel %vm59, %v42, 0
    %63 = vmatprep.subr.mxu0 %v44
    %64 = vmatpush1.msra.mxu0 %v43
    %65 = vmatprep.subr.mxu0 %v46
    %66 = vmatpush1.msra.mxu0 %v45
    %67 = vmatprep.subr.mxu0 0.0
    %68 = vmatpush1.msra.mxu0 0.0
    %69 = vmatprep.subr.mxu0 0.0
    %70 = vmatpush1.msra.mxu0 0.0
    %71 = vmatprep.subr.mxu0 0.0
    %72 = vmatpush1.msra.mxu0 0.0
    %73 = vmatprep.subr.mxu0 0.0
    %74 = vmatpush1.msra.mxu0 0.0
    %75 = vmatprep.subr.mxu0 0.0
    %76 = vmatpush1.msra.mxu0 0.0
    %77 = vmatprep.subr.mxu0 0.0
    %78 = vmatpush1.msra.mxu0 0.0
    %79 = vmatprep.subr.mxu0 0.0
    %80 = vmatpush1.msra.mxu0 0.0
    %81 = vmatprep.subr.mxu0 0.0
    %82 = vmatpush1.msra.mxu0 0.0
    %83 = vmatprep.subr.mxu0 0.0
    %84 = vmatpush1.msra.mxu0 0.0
    %85 = vmatprep.subr.mxu0 0.0
    %86 = vmatpush1.msra.mxu0 0.0
    %87 = vmatprep.subr.mxu0 0.0
    %88 = vmatpush1.msra.mxu0 0.0
    %89 = vmatprep.subr.mxu0 0.0
    %90 = vmatpush1.msra.mxu0 0.0
    %91 = vmatprep.subr.mxu0 0.0
    %92 = vmatpush1.msra.mxu0 0.0
    %93 = vmatprep.subr.mxu0 0.0
    %94 = vmatpush1.msra.mxu0 0.0
    %95 = vmatprep.subr.mxu0 0.0
    %96 = vmatpush1.msra.mxu0 0.0
    %97 = vmatprep.subr.mxu0 0.0
    %98 = vmatpush1.msra.mxu0 0.0
    %99 = vmatprep.subr.mxu0 0.0
    %100 = vmatpush1.msra.mxu0 0.0
    %101 = vmatprep.subr.mxu0 0.0
    %102 = vmatpush1.msra.mxu0 0.0
    %103 = vmatprep.subr.mxu0 0.0
    %104 = vmatpush1.msra.mxu0 0.0
    %105 = vmatprep.subr.mxu0 0.0
    %106 = vmatpush1.msra.mxu0 0.0
    %107 = vmatprep.subr.mxu0 0.0
    %108 = vmatpush1.msra.mxu0 0.0
    %109 = vmatprep.subr.mxu0 0.0
    %110 = vmatpush1.msra.mxu0 0.0
    %111 = vmatprep.subr.mxu0 0.0
    %112 = vmatpush1.msra.mxu0 0.0
    %113 = vmatprep.subr.mxu0 0.0
    %114 = vmatpush1.msra.mxu0 0.0
    %115 = vmatprep.subr.mxu0 0.0
    %116 = vmatpush1.msra.mxu0 0.0
    %117 = vmatprep.subr.mxu0 0.0
    %118 = vmatpush1.msra.mxu0 0.0
    %119 = vmatprep.subr.mxu0 0.0
    %120 = vmatpush1.msra.mxu0 0.0
    %121 = vmatprep.subr.mxu0 0.0
    %122 = vmatpush1.msra.mxu0 0.0
    %123 = vmatprep.subr.mxu0 0.0
    %124 = vmatpush1.msra.mxu0 0.0
    %125 = vmatprep.subr.mxu0 0.0
    %126 = vmatpush1.msra.mxu0 0.0
    %127 = vmatprep.mubr.f32.mxu0 0.0
    %128 = vmatmul.mubr.f32.gmra.mrb[0].mxu0 %v61
    %v129 = vpop.f32.mrb[0].mxu0
    %v130 = vadd.f32 %v52, %v129
    %v131 = vpop.f32.mrb[0].mxu0
    %v132 = vadd.f32 %v56, %v131
    %133 = vdwg.mxu0
    %v134 = vmax.f32 %v130, 0.0
    %v135 = vmax.f32 %v132, 0.0
    %v136 = vld [vmem:[#allocation3] sm:$0xff]
    %v137 = vld [vmem:[#allocation3 + $0x8] sm:$0xff]
    %v138 = vld [vmem:[#allocation3 + $0x10] sm:$0xff]
    %v139 = vld [vmem:[#allocation3 + $0x18] sm:$0xff]
    %v140 = vld [vmem:[#allocation3 + $0x20] sm:$0xff]
    %v141 = vld [vmem:[#allocation3 + $0x28] sm:$0xff]
    %v142 = vld [vmem:[#allocation3 + $0x30] sm:$0xff]
    %v143 = vld [vmem:[#allocation3 + $0x38] sm:$0xff]
    %v144 = vld [vmem:[#allocation3 + $0x40] sm:$0xff]
    %v145 = vld [vmem:[#allocation3 + $0x48] sm:$0xff]
    %v146 = vld [vmem:[#allocation3 + $0x50] sm:$0xff]
    %v147 = vld [vmem:[#allocation3 + $0x58] sm:$0xff]
    %v148 = vld [vmem:[#allocation3 + $0x60] sm:$0xff]
    %v149 = vld [vmem:[#allocation3 + $0x68] sm:$0xff]
    %v150 = vld [vmem:[#allocation3 + $0x70] sm:$0xff]
    %v151 = vld [vmem:[#allocation3 + $0x78] sm:$0xff]
    %v152 = vld [vmem:[#allocation3 + $0x80] sm:$0xff]
    %v153 = vld [vmem:[#allocation3 + $0x88] sm:$0xff]
    %v154 = vld [vmem:[#allocation3 + $0x90] sm:$0xff]
    %v155 = vld [vmem:[#allocation3 + $0x98] sm:$0xff]
    %v156 = vld [vmem:[#allocation3 + $0xa0] sm:$0xff]
    %v157 = vld [vmem:[#allocation3 + $0xa8] sm:$0xff]
    %v158 = vld [vmem:[#allocation3 + $0xb0] sm:$0xff]
    %v159 = vld [vmem:[#allocation3 + $0xb8] sm:$0xff]
    %v160 = vld [vmem:[#allocation3 + $0xc0] sm:$0xff]
    %v161 = vld [vmem:[#allocation3 + $0xc8] sm:$0xff]
    %v162 = vld [vmem:[#allocation3 + $0xd0] sm:$0xff]
    %v163 = vld [vmem:[#allocation3 + $0xd8] sm:$0xff]
    %v164 = vld [vmem:[#allocation3 + $0xe0] sm:$0xff]
    %v165 = vld [vmem:[#allocation3 + $0xe8] sm:$0xff]
    %v166 = vld [vmem:[#allocation3 + $0xf0] sm:$0xff]
    %v167 = vld [vmem:[#allocation3 + $0xf8] sm:$0xff]
    %v168 = vld [vmem:[#allocation3 + $0x100] sm:$0xff]
    %v169 = vld [vmem:[#allocation3 + $0x108] sm:$0xff]
    %v170 = vld [vmem:[#allocation3 + $0x110] sm:$0xff]
    %v171 = vld [vmem:[#allocation3 + $0x118] sm:$0xff]
    %v172 = vld [vmem:[#allocation3 + $0x120] sm:$0xff]
    %v173 = vld [vmem:[#allocation3 + $0x128] sm:$0xff]
    %v174 = vld [vmem:[#allocation3 + $0x130] sm:$0xff]
    %v175 = vld [vmem:[#allocation3 + $0x138] sm:$0xff]
    %v176 = vld [vmem:[#allocation3 + $0x140] sm:$0xff]
    %v177 = vld [vmem:[#allocation3 + $0x148] sm:$0xff]
    %v178 = vld [vmem:[#allocation3 + $0x150] sm:$0xff]
    %v179 = vld [vmem:[#allocation3 + $0x158] sm:$0xff]
    %v180 = vld [vmem:[#allocation3 + $0x160] sm:$0xff]
    %v181 = vld [vmem:[#allocation3 + $0x168] sm:$0xff]
    %v182 = vld [vmem:[#allocation3 + $0x170] sm:$0xff]
    %v183 = vld [vmem:[#allocation3 + $0x178] sm:$0xff]
    %v184 = vld [vmem:[#allocation3 + $0x180] sm:$0xff]
    %v185 = vld [vmem:[#allocation3 + $0x188] sm:$0xff]
    %v186 = vld [vmem:[#allocation3 + $0x190] sm:$0xff]
    %v187 = vld [vmem:[#allocation3 + $0x198] sm:$0xff]
    %v188 = vld [vmem:[#allocation3 + $0x1a0] sm:$0xff]
    %v189 = vld [vmem:[#allocation3 + $0x1a8] sm:$0xff]
    %v190 = vld [vmem:[#allocation3 + $0x1b0] sm:$0xff]
    %v191 = vld [vmem:[#allocation3 + $0x1b8] sm:$0xff]
    %v192 = vld [vmem:[#allocation3 + $0x1c0] sm:$0xff]
    %v193 = vld [vmem:[#allocation3 + $0x1c8] sm:$0xff]
    %v194 = vld [vmem:[#allocation3 + $0x1d0] sm:$0xff]
    %v195 = vld [vmem:[#allocation3 + $0x1d8] sm:$0xff]
    %v196 = vld [vmem:[#allocation3 + $0x1e0] sm:$0xff]
    %v197 = vld [vmem:[#allocation3 + $0x1e8] sm:$0xff]
    %v198 = vld [vmem:[#allocation3 + $0x1f0] sm:$0xff]
    %v199 = vld [vmem:[#allocation3 + $0x1f8] sm:$0xff]
    %v200 = vld [vmem:[%s4] sm:$0x3]
    %v202 = vlaneseq
    %v203 = vshrl.u32 %v202, 7
    %v204 = vsub.s32 0, %v203
    %v205 = vrot.slane %v200, %v204
    %v206 = vlaneseq
    %v207 = vshrl.u32 %v206, 7
    %v208 = vsub.s32 1, %v207
    %v209 = vrot.slane %v200, %v208
    %212 = vmatprep.subr.mxu0 %v137
    %213 = vmatpush1.msra.mxu0 %v136
    %214 = vmatprep.subr.mxu0 %v139
    %215 = vmatpush1.msra.mxu0 %v138
    %216 = vmatprep.subr.mxu0 %v141
    %217 = vmatpush1.msra.mxu0 %v140
    %218 = vmatprep.subr.mxu0 %v143
    %219 = vmatpush1.msra.mxu0 %v142
    %220 = vmatprep.subr.mxu0 %v145
    %221 = vmatpush1.msra.mxu0 %v144
    %222 = vmatprep.subr.mxu0 %v147
    %223 = vmatpush1.msra.mxu0 %v146
    %224 = vmatprep.subr.mxu0 %v149
    %225 = vmatpush1.msra.mxu0 %v148
    %226 = vmatprep.subr.mxu0 %v151
    %227 = vmatpush1.msra.mxu0 %v150
    %228 = vmatprep.subr.mxu0 %v153
    %229 = vmatpush1.msra.mxu0 %v152
    %230 = vmatprep.subr.mxu0 %v155
    %231 = vmatpush1.msra.mxu0 %v154
    %232 = vmatprep.subr.mxu0 %v157
    %233 = vmatpush1.msra.mxu0 %v156
    %234 = vmatprep.subr.mxu0 %v159
    %235 = vmatpush1.msra.mxu0 %v158
    %236 = vmatprep.subr.mxu0 %v161
    %237 = vmatpush1.msra.mxu0 %v160
    %238 = vmatprep.subr.mxu0 %v163
    %239 = vmatpush1.msra.mxu0 %v162
    %240 = vmatprep.subr.mxu0 %v165
    %241 = vmatpush1.msra.mxu0 %v164
    %242 = vmatprep.subr.mxu0 %v167
    %243 = vmatpush1.msra.mxu0 %v166
    %244 = vmatprep.subr.mxu0 %v169
    %245 = vmatpush1.msra.mxu0 %v168
    %246 = vmatprep.subr.mxu0 %v171
    %247 = vmatpush1.msra.mxu0 %v170
    %248 = vmatprep.subr.mxu0 %v173
    %249 = vmatpush1.msra.mxu0 %v172
    %250 = vmatprep.subr.mxu0 %v175
    %251 = vmatpush1.msra.mxu0 %v174
    %252 = vmatprep.subr.mxu0 %v177
    %253 = vmatpush1.msra.mxu0 %v176
    %254 = vmatprep.subr.mxu0 %v179
    %255 = vmatpush1.msra.mxu0 %v178
    %256 = vmatprep.subr.mxu0 %v181
    %257 = vmatpush1.msra.mxu0 %v180
    %258 = vmatprep.subr.mxu0 %v183
    %259 = vmatpush1.msra.mxu0 %v182
    %260 = vmatprep.subr.mxu0 %v185
    %261 = vmatpush1.msra.mxu0 %v184
    %262 = vmatprep.subr.mxu0 %v187
    %263 = vmatpush1.msra.mxu0 %v186
    %264 = vmatprep.subr.mxu0 %v189
    %265 = vmatpush1.msra.mxu0 %v188
    %266 = vmatprep.subr.mxu0 %v191
    %267 = vmatpush1.msra.mxu0 %v190
    %268 = vmatprep.subr.mxu0 %v193
    %269 = vmatpush1.msra.mxu0 %v192
    %270 = vmatprep.subr.mxu0 %v195
    %271 = vmatpush1.msra.mxu0 %v194
    %272 = vmatprep.subr.mxu0 %v197
    %273 = vmatpush1.msra.mxu0 %v196
    %274 = vmatprep.subr.mxu0 %v199
    %275 = vmatpush1.msra.mxu0 %v198
    %276 = vmatprep.mubr.f32.mxu0 %v135
    %277 = vmatmul.mubr.f32.gmra.mrb[0].mxu0 %v134
    %v278 = vpop.f32.mrb[0].mxu0
    %v279 = vadd.f32 %v205, %v278
    %v280 = vpop.f32.mrb[0].mxu0
    %v281 = vadd.f32 %v209, %v280
    %282 = vdwg.mxu0
    %v283 = vmax.f32 %v279, 0.0
    %v284 = vmax.f32 %v281, 0.0
    %v285 = vld [vmem:[%s5] sm:$0x3]
    %v287 = vlaneseq
    %v288 = vshrl.u32 %v287, 7
    %v289 = vsub.s32 0, %v288
    %v290 = vrot.slane %v285, %v289
    %v291 = vlaneseq
    %v292 = vshrl.u32 %v291, 7
    %v293 = vsub.s32 1, %v292
    %v294 = vrot.slane %v285, %v293
    %v297 = vmul.f32 %v283, %v290
    %v298 = vmul.f32 %v284, %v294
    %v299 = vadd.f32 %v297, %v298
    %300 = vadd.xlane.f32.xlu0 %v299
    %v301 = vpop.xlane.xlu0 %300
    %v302 = vld [vmem:[#allocation2] sm:$0x1]
    %v304 = vlaneseq
    %v305 = vshrl.u32 %v304, 7
    %v306 = vsub.s32 0, %v305
    %v307 = vrot.slane %v302, %v306
    %v309 = vadd.f32 %v301, %v307
    %vm310 = vcmask 7168
    %311 = vst.msk [vmem:[%s7] sm:$0xff] %vm310, %v309
    // Predicated region
    $region34: #{qnetwork_forward.1} parent=1 // pred_check
      _
    $region35: #{qnetwork_forward.1} parent=1 // pred_check_branch
      %313 = sbr.rel (0) target = $region37
    $region36: #{qnetwork_forward.1} parent=1 // pred_region
      _
    $region37: #{qnetwork_forward.1} parent=1 // pred_fallthru
      _
    // Predicated region
    $region38: #{qnetwork_forward.1} parent=1 // pred_check
      _
    $region39: #{qnetwork_forward.1} parent=1 // pred_check_branch
      %315 = sbr.rel (0) target = $region41
    $region40: #{qnetwork_forward.1} parent=1 // pred_region
      _
    $region41: #{qnetwork_forward.1} parent=1 // pred_fallthru
      _
    %316 = vsyncpa [#allocation4], 1

</llo_original>
